<compile_context>
chip_gen: v5e
topology: v5e:2x2
jax: 0.10.0
libtpu: 0.0.40
codegen_flags: <defaults>
</compile_context>

<pallas_src>
import numpy as np
import jax
import jax.numpy as jnp
from jax.experimental import pallas as pl
from jax.experimental.pallas import tpu as pltpu

# ---- small, module-consistent config ----
S, N, E, H, FF = 8, 2, 32, 4, 64        # seq, batch, d_model, nhead, dim_feedforward
DH = E // H                              # head dim
SN = S * N                               # flattened (seq * batch) rows
EPS = 1e-5                               # LayerNorm eps (PyTorch default)
NEG_INF = -1e30

# weight-slab column offsets (each 128-aligned so every slice starts at lane 0)
_WQKV_OFF, _WO_OFF, _W1_OFF, _W2_OFF = 0, 128, 256, 384
_W_ROWS, _W_COLS = 64, 512               # rows = max(E, FF), cols padded to 128 multiple


def _layernorm(v, gamma, beta):
    mu = jnp.mean(v, axis=-1, keepdims=True)
    var = jnp.mean(jnp.square(v - mu), axis=-1, keepdims=True)
    return (v - mu) * jax.lax.rsqrt(var + EPS) * gamma + beta


def encoder_layer_kernel(x_ref, w_ref, b_ref, mask_ref, o_ref, hv_ref):
    # x_ref: (SN, E) f32 -- row r corresponds to (seq = r // N, batch = r % N) of the
    # original (S, N, E) tensor (row-major view, no data movement in the wrapper).
    x = x_ref[...]                                                        # (SN, E) f32
    x_bf = x.astype(jnp.bfloat16)

    # ---- static slices of the packed bf16 weight slab (all lane-0 aligned) ----
    wqkv = w_ref[0:E, _WQKV_OFF:_WQKV_OFF + 3 * E]                        # (E, 3E)
    wo   = w_ref[0:E, _WO_OFF:_WO_OFF + E]                                # (E, E)
    w1   = w_ref[0:E, _W1_OFF:_W1_OFF + FF]                               # (E, FF)
    w2   = w_ref[0:FF, _W2_OFF:_W2_OFF + E]                               # (FF, E)

    # ---- static slices of the packed f32 bias / LayerNorm-affine slab ----
    bqkv = b_ref[0:1, 0:3 * E]
    bo   = b_ref[1:2, 0:E]
    b1   = b_ref[2:3, 0:FF]
    b2   = b_ref[3:4, 0:E]
    ln1g = b_ref[4:5, 0:E]
    ln1b = b_ref[5:6, 0:E]
    ln2g = b_ref[6:7, 0:E]
    ln2b = b_ref[7:8, 0:E]

    mask_bias = mask_ref[...]                                             # (SN, SN) f32

    # ---- self-attention: fused QKV projection over all rows at once (bf16 MXU, f32 acc) ----
    qkv = jnp.dot(x_bf, wqkv, preferred_element_type=jnp.float32) + bqkv  # (SN, 3E) f32
    scale = float(1.0 / np.sqrt(DH))
    q = (qkv[:, 0:E] * scale).astype(jnp.bfloat16)
    k = qkv[:, E:2 * E].astype(jnp.bfloat16)
    v = qkv[:, 2 * E:3 * E].astype(jnp.bfloat16)

    for h in range(H):                                                    # static, H = 4
        sl = slice(h * DH, (h + 1) * DH)
        qh, kh, vh = q[:, sl], k[:, sl], v[:, sl]                         # (SN, DH) bf16
        s = jnp.einsum('qd,kd->qk', qh, kh,
                       preferred_element_type=jnp.float32) + mask_bias    # (SN, SN) f32
        s = s - jnp.max(s, axis=-1, keepdims=True)
        p = jnp.exp(s)                                                    # masked cols -> 0
        p = p * pl.reciprocal(jnp.sum(p, axis=-1, keepdims=True), approx=True)
        hv = jnp.dot(p.astype(jnp.bfloat16), vh,
                     preferred_element_type=jnp.float32)                  # (SN, DH) f32
        # Stage this head's output at lane offset h*DH -- "concat" without a relayout.
        hv_ref[:, sl] = hv.astype(jnp.bfloat16)

    # Single K=E out_proj matmul over the staged head-concat (instead of 4 shallow K=DH ones).
    attn = jnp.dot(hv_ref[...], wo, preferred_element_type=jnp.float32) + bo

    # ---- residual + LayerNorm1 (dropout1 = identity in eval mode) ----
    y = _layernorm(x + attn, ln1g, ln1b)

    # ---- feed-forward: linear1 -> relu -> (dropout = id) -> linear2 ----
    h1 = jnp.dot(y.astype(jnp.bfloat16), w1, preferred_element_type=jnp.float32) + b1
    h1 = jnp.maximum(h1, 0.0)
    h2 = jnp.dot(h1.astype(jnp.bfloat16), w2, preferred_element_type=jnp.float32) + b2

    # ---- residual + LayerNorm2 (dropout2 = identity in eval mode) ----
    o_ref[...] = _layernorm(y + h2, ln2g, ln2b)


def pack_params(wqkv_t, bqkv, wo_t, bo, w1_t, b1, w2_t, b2, ln1g, ln1b, ln2g, ln2b):
    """Pack the 12 parameter arrays into one bf16 weight slab + one f32 bias slab,
    and build the compile-time cross-batch mask once (3 kernel inputs total)."""
    w = np.zeros((_W_ROWS, _W_COLS), np.float32)
    w[:E,  _WQKV_OFF:_WQKV_OFF + 3 * E] = np.asarray(wqkv_t)
    w[:E,  _WO_OFF:_WO_OFF + E]         = np.asarray(wo_t)
    w[:E,  _W1_OFF:_W1_OFF + FF]        = np.asarray(w1_t)
    w[:FF, _W2_OFF:_W2_OFF + E]         = np.asarray(w2_t)
    w_slab = jnp.asarray(w, jnp.bfloat16)

    b = np.zeros((8, 128), np.float32)
    b[0, :3 * E] = np.asarray(bqkv)
    b[1, :E]     = np.asarray(bo)
    b[2, :FF]    = np.asarray(b1)
    b[3, :E]     = np.asarray(b2)
    b[4, :E]     = np.asarray(ln1g)
    b[5, :E]     = np.asarray(ln1b)
    b[6, :E]     = np.asarray(ln2g)
    b[7, :E]     = np.asarray(ln2b)
    b_slab = jnp.asarray(b, jnp.float32)

    # additive cross-batch mask: row i may only attend to col j with (i % N) == (j % N)
    r = np.arange(SN)
    mask = np.where((r[:, None] % N) == (r[None, :] % N), 0.0, NEG_INF).astype(np.float32)
    return w_slab, b_slab, jnp.asarray(mask)


@jax.jit
def transformer_encoder_layer(src_sne, w_slab, b_slab, mask_bias):
    """src_sne: (S, N, E) float32, PyTorch layout. Returns (S, N, E)."""
    x2d = src_sne.reshape(SN, E)          # free row-major view, no transpose / copy
    vmem = pl.BlockSpec(memory_space=pltpu.MemorySpace.VMEM)
    out = pl.pallas_call(
        encoder_layer_kernel,
        out_shape=jax.ShapeDtypeStruct((SN, E), jnp.float32),
        in_specs=[vmem, vmem, vmem, vmem],
        out_specs=vmem,
        scratch_shapes=[pltpu.VMEM((SN, E), jnp.bfloat16)],   # staged head-concat
    )(x2d, w_slab, b_slab, mask_bias)
    return out.reshape(S, N, E)           # free view back to PyTorch layout


def reference(src, wqkv_t, bqkv, wo_t, bo, w1_t, b1, w2_t, b2, ln1g, ln1b, ln2g, ln2b):
    """Pure-JAX f32 reference matching PyTorch TransformerEncoderLayer (eval mode)."""
    x = src                                                          # (S, N, E)
    qkv = jnp.einsum('sne,ef->snf', x, wqkv_t) + bqkv
    q, k, v = qkv[..., :E], qkv[..., E:2 * E], qkv[..., 2 * E:]
    q = q.reshape(S, N, H, DH).transpose(1, 2, 0, 3) * (1.0 / np.sqrt(DH))   # (N,H,S,DH)
    k = k.reshape(S, N, H, DH).transpose(1, 2, 0, 3)
    v = v.reshape(S, N, H, DH).transpose(1, 2, 0, 3)
    p = jax.nn.softmax(jnp.einsum('nhqd,nhkd->nhqk', q, k), axis=-1)
    o = jnp.einsum('nhqk,nhkd->nhqd', p, v).transpose(2, 0, 1, 3).reshape(S, N, E)
    o = jnp.einsum('sne,ef->snf', o, wo_t) + bo
    y = _layernorm(x + o, ln1g, ln1b)
    h1 = jnp.maximum(jnp.einsum('sne,ef->snf', y, w1_t) + b1, 0.0)
    h2 = jnp.einsum('snf,fe->sne', h1, w2_t) + b2
    return _layernorm(y + h2, ln2g, ln2b)


if __name__ == "__main__":
    key = jax.random.PRNGKey(0)
    ks = jax.random.split(key, 16)

    def init(k, shape, scale=0.1):
        return scale * jax.random.normal(k, shape, jnp.float32)

    # PyTorch parameter shapes: in_proj_weight (3E,E), out_proj (E,E), linear1 (FF,E),
    # linear2 (E,FF).  Weights are pre-transposed to (in, out) so the kernel does x @ W.
    wqkv = init(ks[0], (3 * E, E));  bqkv = init(ks[1], (3 * E,))
    wo   = init(ks[2], (E, E));      bo   = init(ks[3], (E,))
    w1   = init(ks[4], (FF, E));     b1   = init(ks[5], (FF,))
    w2   = init(ks[6], (E, FF));     b2   = init(ks[7], (E,))
    ln1g = 1.0 + init(ks[8], (E,));  ln1b = init(ks[9], (E,))
    ln2g = 1.0 + init(ks[10], (E,)); ln2b = init(ks[11], (E,))

    raw_params = (wqkv.T, bqkv, wo.T, bo, w1.T, b1, w2.T, b2, ln1g, ln1b, ln2g, ln2b)
    w_slab, b_slab, mask_bias = pack_params(*raw_params)

    src = jax.random.normal(ks[12], (S, N, E), jnp.float32)   # PyTorch layout (S, N, E)

    out = transformer_encoder_layer(src, w_slab, b_slab, mask_bias)
    out = jax.block_until_ready(out)

    ref = reference(src, *raw_params)
    # bf16 MXU operands + approx reciprocal -> ~1e-3..5e-3 deviation from f32 reference.
    np.testing.assert_allclose(np.asarray(out), np.asarray(ref), rtol=2e-2, atol=2e-2)

    print("KERNEL_OK")
</pallas_src>

<mosaic_0001>
module attributes {stable_mosaic.version = 11 : i64} {
  func.func @encoder_layer_kernel(%arg0: memref<16x32xf32, #tpu.memory_space<vmem>>, %arg1: memref<64x512xbf16, #tpu.memory_space<vmem>>, %arg2: memref<8x128xf32, #tpu.memory_space<vmem>>, %arg3: memref<16x16xf32, #tpu.memory_space<vmem>>, %arg4: memref<16x32xf32, #tpu.memory_space<vmem>>, %arg5: memref<16x32xbf16, #tpu.memory_space<vmem>>) attributes {dimension_semantics = [], scalar_prefetch = 0 : i64, scratch_operands = 1 : i64, tpu.core_type = #tpu.core_type<tc>} {
    %c0 = arith.constant 0 : index
    %c0_0 = arith.constant 0 : index
    %0 = vector.load %arg0[%c0, %c0_0] : memref<16x32xf32, #tpu.memory_space<vmem>>, vector<16x32xf32>
    %1 = arith.truncf %0 : vector<16x32xf32> to vector<16x32xbf16>
    %c0_1 = arith.constant 0 : index
    %c0_2 = arith.constant 0 : index
    %2 = vector.load %arg1[%c0_1, %c0_2] : memref<64x512xbf16, #tpu.memory_space<vmem>>, vector<32x96xbf16>
    %c0_3 = arith.constant 0 : index
    %c128 = arith.constant 128 : index
    %3 = vector.load %arg1[%c0_3, %c128] : memref<64x512xbf16, #tpu.memory_space<vmem>>, vector<32x32xbf16>
    %c0_4 = arith.constant 0 : index
    %c256 = arith.constant 256 : index
    %4 = vector.load %arg1[%c0_4, %c256] : memref<64x512xbf16, #tpu.memory_space<vmem>>, vector<32x64xbf16>
    %c0_5 = arith.constant 0 : index
    %c384 = arith.constant 384 : index
    %5 = vector.load %arg1[%c0_5, %c384] : memref<64x512xbf16, #tpu.memory_space<vmem>>, vector<64x32xbf16>
    %c0_6 = arith.constant 0 : index
    %c0_7 = arith.constant 0 : index
    %6 = vector.load %arg2[%c0_6, %c0_7] : memref<8x128xf32, #tpu.memory_space<vmem>>, vector<1x96xf32>
    %c1 = arith.constant 1 : index
    %c0_8 = arith.constant 0 : index
    %7 = vector.load %arg2[%c1, %c0_8] : memref<8x128xf32, #tpu.memory_space<vmem>>, vector<1x32xf32>
    %c2 = arith.constant 2 : index
    %c0_9 = arith.constant 0 : index
    %8 = vector.load %arg2[%c2, %c0_9] : memref<8x128xf32, #tpu.memory_space<vmem>>, vector<1x64xf32>
    %c3 = arith.constant 3 : index
    %c0_10 = arith.constant 0 : index
    %9 = vector.load %arg2[%c3, %c0_10] : memref<8x128xf32, #tpu.memory_space<vmem>>, vector<1x32xf32>
    %c4 = arith.constant 4 : index
    %c0_11 = arith.constant 0 : index
    %10 = vector.load %arg2[%c4, %c0_11] : memref<8x128xf32, #tpu.memory_space<vmem>>, vector<1x32xf32>
    %c5 = arith.constant 5 : index
    %c0_12 = arith.constant 0 : index
    %11 = vector.load %arg2[%c5, %c0_12] : memref<8x128xf32, #tpu.memory_space<vmem>>, vector<1x32xf32>
    %c6 = arith.constant 6 : index
    %c0_13 = arith.constant 0 : index
    %12 = vector.load %arg2[%c6, %c0_13] : memref<8x128xf32, #tpu.memory_space<vmem>>, vector<1x32xf32>
    %c7 = arith.constant 7 : index
    %c0_14 = arith.constant 0 : index
    %13 = vector.load %arg2[%c7, %c0_14] : memref<8x128xf32, #tpu.memory_space<vmem>>, vector<1x32xf32>
    %c0_15 = arith.constant 0 : index
    %c0_16 = arith.constant 0 : index
    %14 = vector.load %arg3[%c0_15, %c0_16] : memref<16x16xf32, #tpu.memory_space<vmem>>, vector<16x16xf32>
    %cst = arith.constant dense<0.000000e+00> : vector<16x96xf32>
    %15 = tpu.matmul %1, %2, %cst {dimension_numbers = #tpu.dot_dimension_numbers<[1], [0], [0], [1], [0, 0, 1, 1], [], []>} : vector<16x32xbf16>, vector<32x96xbf16>, vector<16x96xf32> -> vector<16x96xf32>
    %16 = vector.broadcast %6 : vector<1x96xf32> to vector<16x96xf32>
    %17 = arith.addf %15, %16 : vector<16x96xf32>
    %18 = vector.extract_strided_slice %17 {offsets = [0, 0], sizes = [16, 32], strides = [1, 1]} : vector<16x96xf32> to vector<16x32xf32>
    %cst_17 = arith.constant 0.353553385 : f32
    %19 = vector.broadcast %cst_17 : f32 to vector<16x32xf32>
    %20 = arith.mulf %18, %19 : vector<16x32xf32>
    %21 = arith.truncf %20 : vector<16x32xf32> to vector<16x32xbf16>
    %22 = vector.extract_strided_slice %17 {offsets = [0, 32], sizes = [16, 32], strides = [1, 1]} : vector<16x96xf32> to vector<16x32xf32>
    %23 = arith.truncf %22 : vector<16x32xf32> to vector<16x32xbf16>
    %24 = vector.extract_strided_slice %17 {offsets = [0, 64], sizes = [16, 32], strides = [1, 1]} : vector<16x96xf32> to vector<16x32xf32>
    %25 = arith.truncf %24 : vector<16x32xf32> to vector<16x32xbf16>
    %26 = vector.extract_strided_slice %21 {offsets = [0, 0], sizes = [16, 8], strides = [1, 1]} : vector<16x32xbf16> to vector<16x8xbf16>
    %27 = vector.extract_strided_slice %23 {offsets = [0, 0], sizes = [16, 8], strides = [1, 1]} : vector<16x32xbf16> to vector<16x8xbf16>
    %28 = vector.extract_strided_slice %25 {offsets = [0, 0], sizes = [16, 8], strides = [1, 1]} : vector<16x32xbf16> to vector<16x8xbf16>
    "tpu.trace_start"() <{level = 10 : i32, message = "qd,kd->qk"}> : () -> ()
    %cst_18 = arith.constant dense<0.000000e+00> : vector<16x16xf32>
    %29 = tpu.matmul %26, %27, %cst_18 {dimension_numbers = #tpu.dot_dimension_numbers<[1], [1], [0], [0], [0, 0, 1, 0], [], []>} : vector<16x8xbf16>, vector<16x8xbf16>, vector<16x16xf32> -> vector<16x16xf32>
    "tpu.trace_stop"() : () -> ()
    %30 = arith.addf %29, %14 : vector<16x16xf32>
    %cst_19 = arith.constant dense<0xFF800000> : vector<16xf32>
    %31 = vector.multi_reduction <maximumf>, %30, %cst_19 [1] : vector<16x16xf32> to vector<16xf32>
    %32 = vector.shape_cast %31 : vector<16xf32> to vector<16x1xf32>
    %33 = vector.broadcast %32 : vector<16x1xf32> to vector<16x16xf32>
    %34 = arith.subf %30, %33 : vector<16x16xf32>
    %35 = math.exp %34 : vector<16x16xf32>
    %cst_20 = arith.constant dense<0.000000e+00> : vector<16xf32>
    %36 = vector.multi_reduction <add>, %35, %cst_20 [1] : vector<16x16xf32> to vector<16xf32>
    %37 = vector.shape_cast %36 : vector<16xf32> to vector<16x1xf32>
    %38 = tpu.reciprocal %37 {approx = true} : vector<16x1xf32> -> vector<16x1xf32>
    %39 = vector.broadcast %38 : vector<16x1xf32> to vector<16x16xf32>
    %40 = arith.mulf %35, %39 : vector<16x16xf32>
    %41 = arith.truncf %40 : vector<16x16xf32> to vector<16x16xbf16>
    %cst_21 = arith.constant dense<0.000000e+00> : vector<16x8xf32>
    %42 = tpu.matmul %41, %28, %cst_21 {dimension_numbers = #tpu.dot_dimension_numbers<[1], [0], [0], [1], [0, 0, 1, 1], [], []>} : vector<16x16xbf16>, vector<16x8xbf16>, vector<16x8xf32> -> vector<16x8xf32>
    %43 = arith.truncf %42 : vector<16x8xf32> to vector<16x8xbf16>
    %c0_22 = arith.constant 0 : index
    %c0_23 = arith.constant 0 : index
    %44 = vector.load %arg5[%c0_22, %c0_23] : memref<16x32xbf16, #tpu.memory_space<vmem>>, vector<16x8xbf16>
    tpu.vector_store %arg5[%c0_22, %c0_23], %43 {strides = array<i32>} : memref<16x32xbf16, #tpu.memory_space<vmem>>, vector<16x8xbf16>,
    %45 = vector.extract_strided_slice %21 {offsets = [0, 8], sizes = [16, 8], strides = [1, 1]} : vector<16x32xbf16> to vector<16x8xbf16>
    %46 = vector.extract_strided_slice %23 {offsets = [0, 8], sizes = [16, 8], strides = [1, 1]} : vector<16x32xbf16> to vector<16x8xbf16>
    %47 = vector.extract_strided_slice %25 {offsets = [0, 8], sizes = [16, 8], strides = [1, 1]} : vector<16x32xbf16> to vector<16x8xbf16>
    "tpu.trace_start"() <{level = 10 : i32, message = "qd,kd->qk"}> : () -> ()
    %cst_24 = arith.constant dense<0.000000e+00> : vector<16x16xf32>
    %48 = tpu.matmul %45, %46, %cst_24 {dimension_numbers = #tpu.dot_dimension_numbers<[1], [1], [0], [0], [0, 0, 1, 0], [], []>} : vector<16x8xbf16>, vector<16x8xbf16>, vector<16x16xf32> -> vector<16x16xf32>
    "tpu.trace_stop"() : () -> ()
    %49 = arith.addf %48, %14 : vector<16x16xf32>
    %cst_25 = arith.constant dense<0xFF800000> : vector<16xf32>
    %50 = vector.multi_reduction <maximumf>, %49, %cst_25 [1] : vector<16x16xf32> to vector<16xf32>
    %51 = vector.shape_cast %50 : vector<16xf32> to vector<16x1xf32>
    %52 = vector.broadcast %51 : vector<16x1xf32> to vector<16x16xf32>
    %53 = arith.subf %49, %52 : vector<16x16xf32>
    %54 = math.exp %53 : vector<16x16xf32>
    %cst_26 = arith.constant dense<0.000000e+00> : vector<16xf32>
    %55 = vector.multi_reduction <add>, %54, %cst_26 [1] : vector<16x16xf32> to vector<16xf32>
    %56 = vector.shape_cast %55 : vector<16xf32> to vector<16x1xf32>
    %57 = tpu.reciprocal %56 {approx = true} : vector<16x1xf32> -> vector<16x1xf32>
    %58 = vector.broadcast %57 : vector<16x1xf32> to vector<16x16xf32>
    %59 = arith.mulf %54, %58 : vector<16x16xf32>
    %60 = arith.truncf %59 : vector<16x16xf32> to vector<16x16xbf16>
    %cst_27 = arith.constant dense<0.000000e+00> : vector<16x8xf32>
    %61 = tpu.matmul %60, %47, %cst_27 {dimension_numbers = #tpu.dot_dimension_numbers<[1], [0], [0], [1], [0, 0, 1, 1], [], []>} : vector<16x16xbf16>, vector<16x8xbf16>, vector<16x8xf32> -> vector<16x8xf32>
    %62 = arith.truncf %61 : vector<16x8xf32> to vector<16x8xbf16>
    %c0_28 = arith.constant 0 : index
    %c8 = arith.constant 8 : index
    %63 = vector.load %arg5[%c0_28, %c8] : memref<16x32xbf16, #tpu.memory_space<vmem>>, vector<16x8xbf16>
    tpu.vector_store %arg5[%c0_28, %c8], %62 {strides = array<i32>} : memref<16x32xbf16, #tpu.memory_space<vmem>>, vector<16x8xbf16>,
    %64 = vector.extract_strided_slice %21 {offsets = [0, 16], sizes = [16, 8], strides = [1, 1]} : vector<16x32xbf16> to vector<16x8xbf16>
    %65 = vector.extract_strided_slice %23 {offsets = [0, 16], sizes = [16, 8], strides = [1, 1]} : vector<16x32xbf16> to vector<16x8xbf16>
    %66 = vector.extract_strided_slice %25 {offsets = [0, 16], sizes = [16, 8], strides = [1, 1]} : vector<16x32xbf16> to vector<16x8xbf16>
    "tpu.trace_start"() <{level = 10 : i32, message = "qd,kd->qk"}> : () -> ()
    %cst_29 = arith.constant dense<0.000000e+00> : vector<16x16xf32>
    %67 = tpu.matmul %64, %65, %cst_29 {dimension_numbers = #tpu.dot_dimension_numbers<[1], [1], [0], [0], [0, 0, 1, 0], [], []>} : vector<16x8xbf16>, vector<16x8xbf16>, vector<16x16xf32> -> vector<16x16xf32>
    "tpu.trace_stop"() : () -> ()
    %68 = arith.addf %67, %14 : vector<16x16xf32>
    %cst_30 = arith.constant dense<0xFF800000> : vector<16xf32>
    %69 = vector.multi_reduction <maximumf>, %68, %cst_30 [1] : vector<16x16xf32> to vector<16xf32>
    %70 = vector.shape_cast %69 : vector<16xf32> to vector<16x1xf32>
    %71 = vector.broadcast %70 : vector<16x1xf32> to vector<16x16xf32>
    %72 = arith.subf %68, %71 : vector<16x16xf32>
    %73 = math.exp %72 : vector<16x16xf32>
    %cst_31 = arith.constant dense<0.000000e+00> : vector<16xf32>
    %74 = vector.multi_reduction <add>, %73, %cst_31 [1] : vector<16x16xf32> to vector<16xf32>
    %75 = vector.shape_cast %74 : vector<16xf32> to vector<16x1xf32>
    %76 = tpu.reciprocal %75 {approx = true} : vector<16x1xf32> -> vector<16x1xf32>
    %77 = vector.broadcast %76 : vector<16x1xf32> to vector<16x16xf32>
    %78 = arith.mulf %73, %77 : vector<16x16xf32>
    %79 = arith.truncf %78 : vector<16x16xf32> to vector<16x16xbf16>
    %cst_32 = arith.constant dense<0.000000e+00> : vector<16x8xf32>
    %80 = tpu.matmul %79, %66, %cst_32 {dimension_numbers = #tpu.dot_dimension_numbers<[1], [0], [0], [1], [0, 0, 1, 1], [], []>} : vector<16x16xbf16>, vector<16x8xbf16>, vector<16x8xf32> -> vector<16x8xf32>
    %81 = arith.truncf %80 : vector<16x8xf32> to vector<16x8xbf16>
    %c0_33 = arith.constant 0 : index
    %c16 = arith.constant 16 : index
    %82 = vector.load %arg5[%c0_33, %c16] : memref<16x32xbf16, #tpu.memory_space<vmem>>, vector<16x8xbf16>
    tpu.vector_store %arg5[%c0_33, %c16], %81 {strides = array<i32>} : memref<16x32xbf16, #tpu.memory_space<vmem>>, vector<16x8xbf16>,
    %83 = vector.extract_strided_slice %21 {offsets = [0, 24], sizes = [16, 8], strides = [1, 1]} : vector<16x32xbf16> to vector<16x8xbf16>
    %84 = vector.extract_strided_slice %23 {offsets = [0, 24], sizes = [16, 8], strides = [1, 1]} : vector<16x32xbf16> to vector<16x8xbf16>
    %85 = vector.extract_strided_slice %25 {offsets = [0, 24], sizes = [16, 8], strides = [1, 1]} : vector<16x32xbf16> to vector<16x8xbf16>
    "tpu.trace_start"() <{level = 10 : i32, message = "qd,kd->qk"}> : () -> ()
    %cst_34 = arith.constant dense<0.000000e+00> : vector<16x16xf32>
    %86 = tpu.matmul %83, %84, %cst_34 {dimension_numbers = #tpu.dot_dimension_numbers<[1], [1], [0], [0], [0, 0, 1, 0], [], []>} : vector<16x8xbf16>, vector<16x8xbf16>, vector<16x16xf32> -> vector<16x16xf32>
    "tpu.trace_stop"() : () -> ()
    %87 = arith.addf %86, %14 : vector<16x16xf32>
    %cst_35 = arith.constant dense<0xFF800000> : vector<16xf32>
    %88 = vector.multi_reduction <maximumf>, %87, %cst_35 [1] : vector<16x16xf32> to vector<16xf32>
    %89 = vector.shape_cast %88 : vector<16xf32> to vector<16x1xf32>
    %90 = vector.broadcast %89 : vector<16x1xf32> to vector<16x16xf32>
    %91 = arith.subf %87, %90 : vector<16x16xf32>
    %92 = math.exp %91 : vector<16x16xf32>
    %cst_36 = arith.constant dense<0.000000e+00> : vector<16xf32>
    %93 = vector.multi_reduction <add>, %92, %cst_36 [1] : vector<16x16xf32> to vector<16xf32>
    %94 = vector.shape_cast %93 : vector<16xf32> to vector<16x1xf32>
    %95 = tpu.reciprocal %94 {approx = true} : vector<16x1xf32> -> vector<16x1xf32>
    %96 = vector.broadcast %95 : vector<16x1xf32> to vector<16x16xf32>
    %97 = arith.mulf %92, %96 : vector<16x16xf32>
    %98 = arith.truncf %97 : vector<16x16xf32> to vector<16x16xbf16>
    %cst_37 = arith.constant dense<0.000000e+00> : vector<16x8xf32>
    %99 = tpu.matmul %98, %85, %cst_37 {dimension_numbers = #tpu.dot_dimension_numbers<[1], [0], [0], [1], [0, 0, 1, 1], [], []>} : vector<16x16xbf16>, vector<16x8xbf16>, vector<16x8xf32> -> vector<16x8xf32>
    %100 = arith.truncf %99 : vector<16x8xf32> to vector<16x8xbf16>
    %c0_38 = arith.constant 0 : index
    %c24 = arith.constant 24 : index
    %101 = vector.load %arg5[%c0_38, %c24] : memref<16x32xbf16, #tpu.memory_space<vmem>>, vector<16x8xbf16>
    tpu.vector_store %arg5[%c0_38, %c24], %100 {strides = array<i32>} : memref<16x32xbf16, #tpu.memory_space<vmem>>, vector<16x8xbf16>,
    %c0_39 = arith.constant 0 : index
    %c0_40 = arith.constant 0 : index
    %102 = vector.load %arg5[%c0_39, %c0_40] : memref<16x32xbf16, #tpu.memory_space<vmem>>, vector<16x32xbf16>
    %cst_41 = arith.constant dense<0.000000e+00> : vector<16x32xf32>
    %103 = tpu.matmul %102, %3, %cst_41 {dimension_numbers = #tpu.dot_dimension_numbers<[1], [0], [0], [1], [0, 0, 1, 1], [], []>} : vector<16x32xbf16>, vector<32x32xbf16>, vector<16x32xf32> -> vector<16x32xf32>
    %104 = vector.broadcast %7 : vector<1x32xf32> to vector<16x32xf32>
    %105 = arith.addf %103, %104 : vector<16x32xf32>
    %106 = arith.addf %0, %105 : vector<16x32xf32>
    %cst_42 = arith.constant dense<0.000000e+00> : vector<16xf32>
    %107 = vector.multi_reduction <add>, %106, %cst_42 [1] : vector<16x32xf32> to vector<16xf32>
    %108 = vector.shape_cast %107 : vector<16xf32> to vector<16x1xf32>
    %cst_43 = arith.constant 3.200000e+01 : f32
    %109 = vector.broadcast %cst_43 : f32 to vector<16x1xf32>
    %110 = arith.divf %108, %109 : vector<16x1xf32>
    %111 = vector.broadcast %110 : vector<16x1xf32> to vector<16x32xf32>
    %112 = arith.subf %106, %111 : vector<16x32xf32>
    %113 = arith.mulf %112, %112 : vector<16x32xf32>
    %cst_44 = arith.constant dense<0.000000e+00> : vector<16xf32>
    %114 = vector.multi_reduction <add>, %113, %cst_44 [1] : vector<16x32xf32> to vector<16xf32>
    %115 = vector.shape_cast %114 : vector<16xf32> to vector<16x1xf32>
    %cst_45 = arith.constant 3.200000e+01 : f32
    %116 = vector.broadcast %cst_45 : f32 to vector<16x1xf32>
    %117 = arith.divf %115, %116 : vector<16x1xf32>
    %118 = vector.broadcast %110 : vector<16x1xf32> to vector<16x32xf32>
    %119 = arith.subf %106, %118 : vector<16x32xf32>
    %cst_46 = arith.constant 9.99999974E-6 : f32
    %120 = vector.broadcast %cst_46 : f32 to vector<16x1xf32>
    %121 = arith.addf %117, %120 : vector<16x1xf32>
    %122 = math.rsqrt %121 : vector<16x1xf32>
    %123 = vector.broadcast %122 : vector<16x1xf32> to vector<16x32xf32>
    %124 = arith.mulf %119, %123 : vector<16x32xf32>
    %125 = vector.broadcast %10 : vector<1x32xf32> to vector<16x32xf32>
    %126 = arith.mulf %124, %125 : vector<16x32xf32>
    %127 = vector.broadcast %11 : vector<1x32xf32> to vector<16x32xf32>
    %128 = arith.addf %126, %127 : vector<16x32xf32>
    %129 = arith.truncf %128 : vector<16x32xf32> to vector<16x32xbf16>
    %cst_47 = arith.constant dense<0.000000e+00> : vector<16x64xf32>
    %130 = tpu.matmul %129, %4, %cst_47 {dimension_numbers = #tpu.dot_dimension_numbers<[1], [0], [0], [1], [0, 0, 1, 1], [], []>} : vector<16x32xbf16>, vector<32x64xbf16>, vector<16x64xf32> -> vector<16x64xf32>
    %131 = vector.broadcast %8 : vector<1x64xf32> to vector<16x64xf32>
    %132 = arith.addf %130, %131 : vector<16x64xf32>
    %cst_48 = arith.constant 0.000000e+00 : f32
    %133 = vector.broadcast %cst_48 : f32 to vector<16x64xf32>
    %134 = arith.maximumf %132, %133 : vector<16x64xf32>
    %135 = arith.truncf %134 : vector<16x64xf32> to vector<16x64xbf16>
    %cst_49 = arith.constant dense<0.000000e+00> : vector<16x32xf32>
    %136 = tpu.matmul %135, %5, %cst_49 {dimension_numbers = #tpu.dot_dimension_numbers<[1], [0], [0], [1], [0, 0, 1, 1], [], []>} : vector<16x64xbf16>, vector<64x32xbf16>, vector<16x32xf32> -> vector<16x32xf32>
    %137 = vector.broadcast %9 : vector<1x32xf32> to vector<16x32xf32>
    %138 = arith.addf %136, %137 : vector<16x32xf32>
    %139 = arith.addf %128, %138 : vector<16x32xf32>
    %cst_50 = arith.constant dense<0.000000e+00> : vector<16xf32>
    %140 = vector.multi_reduction <add>, %139, %cst_50 [1] : vector<16x32xf32> to vector<16xf32>
    %141 = vector.shape_cast %140 : vector<16xf32> to vector<16x1xf32>
    %cst_51 = arith.constant 3.200000e+01 : f32
    %142 = vector.broadcast %cst_51 : f32 to vector<16x1xf32>
    %143 = arith.divf %141, %142 : vector<16x1xf32>
    %144 = vector.broadcast %143 : vector<16x1xf32> to vector<16x32xf32>
    %145 = arith.subf %139, %144 : vector<16x32xf32>
    %146 = arith.mulf %145, %145 : vector<16x32xf32>
    %cst_52 = arith.constant dense<0.000000e+00> : vector<16xf32>
    %147 = vector.multi_reduction <add>, %146, %cst_52 [1] : vector<16x32xf32> to vector<16xf32>
    %148 = vector.shape_cast %147 : vector<16xf32> to vector<16x1xf32>
    %cst_53 = arith.constant 3.200000e+01 : f32
    %149 = vector.broadcast %cst_53 : f32 to vector<16x1xf32>
    %150 = arith.divf %148, %149 : vector<16x1xf32>
    %151 = vector.broadcast %143 : vector<16x1xf32> to vector<16x32xf32>
    %152 = arith.subf %139, %151 : vector<16x32xf32>
    %cst_54 = arith.constant 9.99999974E-6 : f32
    %153 = vector.broadcast %cst_54 : f32 to vector<16x1xf32>
    %154 = arith.addf %150, %153 : vector<16x1xf32>
    %155 = math.rsqrt %154 : vector<16x1xf32>
    %156 = vector.broadcast %155 : vector<16x1xf32> to vector<16x32xf32>
    %157 = arith.mulf %152, %156 : vector<16x32xf32>
    %158 = vector.broadcast %12 : vector<1x32xf32> to vector<16x32xf32>
    %159 = arith.mulf %157, %158 : vector<16x32xf32>
    %160 = vector.broadcast %13 : vector<1x32xf32> to vector<16x32xf32>
    %161 = arith.addf %159, %160 : vector<16x32xf32>
    %c0_55 = arith.constant 0 : index
    %c0_56 = arith.constant 0 : index
    %162 = vector.load %arg4[%c0_55, %c0_56] : memref<16x32xf32, #tpu.memory_space<vmem>>, vector<16x32xf32>
    tpu.vector_store %arg4[%c0_55, %c0_56], %161 {strides = array<i32>} : memref<16x32xf32, #tpu.memory_space<vmem>>, vector<16x32xf32>,
    return
  }
}

</mosaic_0001>

<llo_original>
// kernel: transformer_encoder_layer.1
$region0: #{transformer_encoder_layer.1}
  #allocation0 [shape = 'u32[]', space=smem, size = 0x4, offset = 0x4, fixed_abs, tag = 'smem constant byte address 0x4 - core index']
  #allocation1 [shape = 'u32[72,128]{1,0:T(1,128)}', space=vmem, size = 0x9000, scoped, tag = 'internal scratch']
  #allocation2 [shape = 'bf16[16,32]{1,0:T(8,128)(2,1)}', space=vmem, size = 0x1000, scoped, tag = 'scratch operand']
  %s0 = inlined_call_operand.hbm [shape: f32[16,32], index: 0, kind: input, shape index: {}]
  %s1 = inlined_call_operand.hbm [shape: bf16[64,512], index: 1, kind: input, shape index: {}]
  %s2 = inlined_call_operand.hbm [shape: f32[8,128], index: 2, kind: input, shape index: {}]
  %s3 = inlined_call_operand.hbm [shape: f32[16,16], index: 3, kind: input, shape index: {}]
  %s4 = inlined_call_operand.hbm [shape: f32[16,32], index: 4, kind: output, shape index: {}]
  %s5 = sld [smem:[#allocation0]]
  $region42: #{transformer_encoder_layer.1} parent=0
    _
  %s7 = ssub.s32 1, %s5
  %s8 = scalar_select 0, %s7, %s5
  $region1: #{transformer_encoder_layer.1} parent=0
    #allocation3 [shape = 'u8[8192]{0}', space=vmem, size = 0x2000, scoped, tag = 'input window, operand 0, single buffered']
    #allocation4 [shape = 's32[1]{0}', space=sflag, size = 0x4, scoped, tag = 'scoped memory for transformer_encoder_layer.1']
    #allocation5 [shape = 's32[1]{0}', space=sflag, size = 0x4, scoped, tag = 'scoped memory for transformer_encoder_layer.1']
    #allocation6 [shape = 'u8[65536]{0}', space=vmem, size = 0x10000, scoped, tag = 'input window, operand 1, single buffered']
    #allocation7 [shape = 's32[1]{0}', space=sflag, size = 0x4, scoped, tag = 'scoped memory for transformer_encoder_layer.1']
    #allocation8 [shape = 'u8[4096]{0}', space=vmem, size = 0x1000, scoped, tag = 'input window, operand 2, single buffered']
    #allocation9 [shape = 'u8[8192]{0}', space=vmem, size = 0x2000, scoped, tag = 'input window, operand 3, single buffered']
    #allocation10 [shape = 's32[1]{0}', space=sflag, size = 0x4, scoped, tag = 'scoped memory for transformer_encoder_layer.1']
    #allocation11 [shape = 'u8[8192]{0}', space=vmem, size = 0x2000, scoped, tag = 'output window, operand 0, single buffered']
    %9 = vsyncpa [#allocation4], 0
    %10 = vsyncpa [#allocation7], 0
    %11 = vsyncpa [#allocation10], 0
    %12 = vsyncpa [#allocation5], 0
    // Predicated region
    $region2: #{transformer_encoder_layer.1} parent=1 // pred_check
      _
    $region3: #{transformer_encoder_layer.1} parent=1 // pred_check_branch
      %14 = sbr.rel (0) target = $region5
    $region4: #{transformer_encoder_layer.1} parent=1 // pred_region
      %16 = vsyncadd [#allocation4], 0
      %s17 = sshll.u32 %s0, 4
      %s18 = int_to_ptr.hbm [resolvable:$true] %s17
      %s19 = sshll.u32 [#allocation3], 4
      %s20 = int_to_ptr.vmem [resolvable:$true] %s19
      %25 = dma.hbm_to_vmem [thread:$0]  %s18, 256, %s20, [#allocation4], 128, 128, 8
    $region5: #{transformer_encoder_layer.1} parent=1 // pred_fallthru
      _
    // Predicated region
    $region6: #{transformer_encoder_layer.1} parent=1 // pred_check
      _
    $region7: #{transformer_encoder_layer.1} parent=1 // pred_check_branch
      %27 = sbr.rel (0) target = $region9
    $region8: #{transformer_encoder_layer.1} parent=1 // pred_region
      %29 = vsyncadd [#allocation7], 0
      %s30 = sshll.u32 %s1, 4
      %s31 = int_to_ptr.hbm [resolvable:$true] %s30
      %s32 = sshll.u32 [#allocation6], 4
      %s33 = int_to_ptr.vmem [resolvable:$true] %s32
      %38 = dma.hbm_to_vmem [thread:$0]  %s31, 2048, %s33, [#allocation7], 256, 256, 16
    $region9: #{transformer_encoder_layer.1} parent=1 // pred_fallthru
      _
    // Predicated region
    $region10: #{transformer_encoder_layer.1} parent=1 // pred_check
      _
    $region11: #{transformer_encoder_layer.1} parent=1 // pred_check_branch
      %40 = sbr.rel (0) target = $region13
    $region12: #{transformer_encoder_layer.1} parent=1 // pred_region
      %42 = vsyncadd [#allocation7], 0
      %s44 = sshll.u32 %s2, 4
      %s45 = int_to_ptr.hbm [resolvable:$true] %s44
      %s46 = sshll.u32 [#allocation8], 4
      %s47 = int_to_ptr.vmem [resolvable:$true] %s46
      %49 = dma.hbm_to_vmem [thread:$0]  %s45, 128, %s47, [#allocation7]
    $region13: #{transformer_encoder_layer.1} parent=1 // pred_fallthru
      _
    // Predicated region
    $region14: #{transformer_encoder_layer.1} parent=1 // pred_check
      _
    $region15: #{transformer_encoder_layer.1} parent=1 // pred_check_branch
      %51 = sbr.rel (0) target = $region17
    $region16: #{transformer_encoder_layer.1} parent=1 // pred_region
      %53 = vsyncadd [#allocation10], 0
      %s54 = sshll.u32 %s3, 4
      %s55 = int_to_ptr.hbm [resolvable:$true] %s54
      %s56 = sshll.u32 [#allocation9], 4
      %s57 = int_to_ptr.vmem [resolvable:$true] %s56
      %62 = dma.hbm_to_vmem [thread:$0]  %s55, 256, %s57, [#allocation10], 128, 128, 8
    $region17: #{transformer_encoder_layer.1} parent=1 // pred_fallthru
      _
    // Predicated region
    $region18: #{transformer_encoder_layer.1} parent=1 // pred_check
      _
    $region19: #{transformer_encoder_layer.1} parent=1 // pred_check_branch
      %64 = sbr.rel (0) target = $region21
    $region20: #{transformer_encoder_layer.1} parent=1 // pred_region
      %66 = dma.done [#allocation4], 256
    $region21: #{transformer_encoder_layer.1} parent=1 // pred_fallthru
      _
    // Predicated region
    $region22: #{transformer_encoder_layer.1} parent=1 // pred_check
      _
    $region23: #{transformer_encoder_layer.1} parent=1 // pred_check_branch
      %68 = sbr.rel (0) target = $region25
    $region24: #{transformer_encoder_layer.1} parent=1 // pred_region
      %70 = dma.done [#allocation7], 2048
    $region25: #{transformer_encoder_layer.1} parent=1 // pred_fallthru
      _
    // Predicated region
    $region26: #{transformer_encoder_layer.1} parent=1 // pred_check
      _
    $region27: #{transformer_encoder_layer.1} parent=1 // pred_check_branch
      %72 = sbr.rel (0) target = $region29
    $region28: #{transformer_encoder_layer.1} parent=1 // pred_region
      %74 = dma.done [#allocation7], 128
    $region29: #{transformer_encoder_layer.1} parent=1 // pred_fallthru
      _
    // Predicated region
    $region30: #{transformer_encoder_layer.1} parent=1 // pred_check
      _
    $region31: #{transformer_encoder_layer.1} parent=1 // pred_check_branch
      %76 = sbr.rel (0) target = $region33
    $region32: #{transformer_encoder_layer.1} parent=1 // pred_region
      %78 = dma.done [#allocation10], 256
    $region33: #{transformer_encoder_layer.1} parent=1 // pred_fallthru
      _
    %v80 = vld [vmem:[#allocation3] sm:$0xff]
    %v81 = vld [vmem:[#allocation3 + $0x8] sm:$0xff]
    %v82 = vpack.c.bf16 %v81, %v80
    %v83 = vld [vmem:[#allocation6] sm:$0xf]
    %v84 = vld [vmem:[#allocation6 + $0x10] sm:$0xf]
    %v85 = vld [vmem:[#allocation6 + $0x20] sm:$0xf]
    %v86 = vld [vmem:[#allocation6 + $0x30] sm:$0xf]
    %v87 = vld [vmem:[#allocation6 + $0x4] sm:$0xf]
    %v88 = vld [vmem:[#allocation6 + $0x14] sm:$0xf]
    %v89 = vld [vmem:[#allocation6 + $0x24] sm:$0xf]
    %v90 = vld [vmem:[#allocation6 + $0x34] sm:$0xf]
    %v91 = vld [vmem:[#allocation6 + $0x8] sm:$0xf]
    %v92 = vld [vmem:[#allocation6 + $0x18] sm:$0xf]
    %v93 = vld [vmem:[#allocation6 + $0x28] sm:$0xf]
    %v94 = vld [vmem:[#allocation6 + $0x38] sm:$0xf]
    %v95 = vld [vmem:[#allocation6 + $0xc] sm:$0xf]
    %v96 = vld [vmem:[#allocation6 + $0x1c] sm:$0xf]
    %v97 = vld [vmem:[#allocation6 + $0x2c] sm:$0xf]
    %v98 = vld [vmem:[#allocation6 + $0x3c] sm:$0xf]
    %v99 = vld [vmem:[#allocation6 + $0x4c] sm:$0xf]
    %v100 = vld [vmem:[#allocation6 + $0x5c] sm:$0xf]
    %v101 = vld [vmem:[#allocation6 + $0x6c] sm:$0xf]
    %v102 = vld [vmem:[#allocation6 + $0x7c] sm:$0xf]
    %v103 = vld [vmem:[#allocation8] sm:$0x1]
    %v104 = vld [vmem:[#allocation8 + $0x1] sm:$0x1]
    %v105 = vld [vmem:[#allocation8 + $0x2] sm:$0x1]
    %v106 = vld [vmem:[#allocation8 + $0x3] sm:$0x1]
    %v107 = vld [vmem:[#allocation8 + $0x4] sm:$0x1]
    %v108 = vld [vmem:[#allocation8 + $0x5] sm:$0x1]
    %v109 = vld [vmem:[#allocation8 + $0x6] sm:$0x1]
    %v110 = vld [vmem:[#allocation8 + $0x7] sm:$0x1]
    %v111 = vld [vmem:[#allocation9] sm:$0xff]
    %v112 = vld [vmem:[#allocation9 + $0x8] sm:$0xff]
    %v113 = vperm.slane %v103, 0
    %v118 = vunpack.c.l.b16 %v83
    %v119 = vunpack.c.l.b16 %v84
    %v120 = vunpack.c.l.b16 %v85
    %v121 = vunpack.c.l.b16 %v86
    %v122 = vpack.c.b16 %v119, %v118
    %v123 = vpack.c.b16 %v121, %v120
    %vm126 = vcmask 261120
    %v128 = vsel %vm126, %v82, 0
    %130 = vmatpush.bf16.msra.mxu0 0
    %131 = vmatpush.bf16.msra.mxu0 0
    %132 = vmatpush.bf16.msra.mxu0 0
    %133 = vmatpush.bf16.msra.mxu0 0
    %134 = vmatpush.bf16.msra.mxu0 0
    %135 = vmatpush.bf16.msra.mxu0 0
    %136 = vmatpush.bf16.msra.mxu0 %v123
    %137 = vmatpush.bf16.msra.mxu0 %v122
    %138 = vmatmul.bf16.gmra.mxu0 %v128
    %v139 = vpop.f32.mrf.mxu0
    %v140 = vadd.f32 %v113, %v139
    %v141 = vpop.f32.mrf.mxu0
    %v142 = vadd.f32 %v113, %v141
    %143 = vdwg.mxu0
    %v144 = vmul.f32 %v140, 0.35355338
    %v145 = vmul.f32 %v142, 0.35355338
    %v146 = vpack.c.bf16 %v144, %v144
    %v147 = vpack.c.bf16 %v145, %v145
    %v148 = vpack.c.bf16 %v140, %v140
    %v149 = vpack.c.bf16 %v142, %v142
    %v152 = vunpack.c.l.b16 %v146
    %v153 = vunpack.c.l.b16 %v147
    %v154 = vpack.c.b16 %v153, %v152
    %v157 = vunpack.c.l.b16 %v148
    %v158 = vunpack.c.l.b16 %v149
    %v159 = vpack.c.b16 %v158, %v157
    %160 = vrot.lane.b32.xlu0 %v159, 96
    %v161 = vpop.permute.xlu0 %160
    %vm162 = vcmask 64512
    %v164 = vsel %vm162, %v154, 0
    %v167 = vsel %vm162, %v161, 0
    %169 = vmatpush.bf16.xpose.msra.mxu0 0
    %170 = vmatpush.bf16.xpose.msra.mxu0 0
    %171 = vmatpush.bf16.xpose.msra.mxu0 0
    %172 = vmatpush.bf16.xpose.msra.mxu0 0
    %173 = vmatpush.bf16.xpose.msra.mxu0 0
    %174 = vmatpush.bf16.xpose.msra.mxu0 0
    %175 = vmatpush.bf16.xpose.msra.mxu0 0
    %176 = vmatpush.bf16.xpose.msra.mxu0 %v167
    %177 = vmatmul.bf16.gmra.mxu0 %v164
    %v178 = vpop.f32.mrf.mxu0
    %v179 = vadd.f32 %v111, %v178
    %v180 = vpop.f32.mrf.mxu0
    %v181 = vadd.f32 %v112, %v180
    %182 = vdwg.mxu0
    %vm183 = vcmask 130048
    %v184 = vsel %vm183, %v179, -inf
    %185 = vmax.xlane.f32.xlu0 %v184
    %v186 = vpop.xlane.xlu0 %185
    %v187 = vsel %vm183, %v181, -inf
    %188 = vmax.xlane.f32.xlu0 %v187
    %v189 = vpop.xlane.xlu0 %188
    %v190 = vsub.f32 %v179, %v186
    %v191 = vsub.f32 %v181, %v189
    %v192 = vmul.f32 %v190, 1.442695
    %v193 = vpow.pop %v192
    %v194 = vmul.f32 %v191, 1.442695
    %v195 = vpow.pop %v194
    %v196 = vsel %vm183, %v193, 0.0
    %197 = vadd.xlane.f32.xlu0 %v196
    %v198 = vpop.xlane.xlu0 %197
    %v199 = vsel %vm183, %v195, 0.0
    %200 = vadd.xlane.f32.xlu0 %v199
    %v201 = vpop.xlane.xlu0 %200
    %v202 = vrcp.pop %v198
    %v203 = vrcp.pop %v201
    %v204 = vmul.f32 %v193, %v202
    %v205 = vmul.f32 %v195, %v203
    %v206 = vpack.c.bf16 %v205, %v204
    %207 = vrot.lane.b32.xlu0 %v159, 64
    %v208 = vpop.permute.xlu0 %207
    %v211 = vsel %vm183, %v206, 0
    %213 = vmatpush.bf16.msra.mxu0 0
    %214 = vmatpush.bf16.msra.mxu0 0
    %215 = vmatpush.bf16.msra.mxu0 0
    %216 = vmatpush.bf16.msra.mxu0 0
    %217 = vmatpush.bf16.msra.mxu0 0
    %218 = vmatpush.bf16.msra.mxu0 0
    %219 = vmatpush.bf16.msra.mxu0 0
    %220 = vmatpush.bf16.msra.mxu0 %v208
    %221 = vmatmul.bf16.gmra.mxu0 %v211
    %v222 = vpop.f32.mrf.mxu0
    %v223 = vadd.f32 0.0, %v222
    %v224 = vpop.f32.mrf.mxu0
    %v225 = vadd.f32 0.0, %v224
    %226 = vdwg.mxu0
    %v227 = vpack.c.bf16 %v223, %v223
    %v228 = vpack.c.bf16 %v225, %v225
    %vm229 = vcmask 60416
    %230 = vst.msk [vmem:[#allocation2] sm:$0xf] %vm229, %v227
    %231 = vst.msk [vmem:[#allocation2 + $0x4] sm:$0xf] %vm229, %v228
    %232 = vrot.lane.b32.xlu0 %v154, 120
    %v233 = vpop.permute.xlu0 %232
    %234 = vrot.lane.b32.xlu0 %v159, 88
    %v235 = vpop.permute.xlu0 %234
    %v237 = vsel %vm162, %v233, 0
    %v240 = vsel %vm162, %v235, 0
    %242 = vmatpush.bf16.xpose.msra.mxu0 0
    %243 = vmatpush.bf16.xpose.msra.mxu0 0
    %244 = vmatpush.bf16.xpose.msra.mxu0 0
    %245 = vmatpush.bf16.xpose.msra.mxu0 0
    %246 = vmatpush.bf16.xpose.msra.mxu0 0
    %247 = vmatpush.bf16.xpose.msra.mxu0 0
    %248 = vmatpush.bf16.xpose.msra.mxu0 0
    %249 = vmatpush.bf16.xpose.msra.mxu0 %v240
    %250 = vmatmul.bf16.gmra.mxu0 %v237
    %v251 = vpop.f32.mrf.mxu0
    %v252 = vadd.f32 %v111, %v251
    %v253 = vpop.f32.mrf.mxu0
    %v254 = vadd.f32 %v112, %v253
    %255 = vdwg.mxu0
    %v256 = vsel %vm183, %v252, -inf
    %257 = vmax.xlane.f32.xlu0 %v256
    %v258 = vpop.xlane.xlu0 %257
    %v259 = vsel %vm183, %v254, -inf
    %260 = vmax.xlane.f32.xlu0 %v259
    %v261 = vpop.xlane.xlu0 %260
    %v262 = vsub.f32 %v252, %v258
    %v263 = vsub.f32 %v254, %v261
    %v264 = vmul.f32 %v262, 1.442695
    %v265 = vpow.pop %v264
    %v266 = vmul.f32 %v263, 1.442695
    %v267 = vpow.pop %v266
    %v268 = vsel %vm183, %v265, 0.0
    %269 = vadd.xlane.f32.xlu0 %v268
    %v270 = vpop.xlane.xlu0 %269
    %v271 = vsel %vm183, %v267, 0.0
    %272 = vadd.xlane.f32.xlu0 %v271
    %v273 = vpop.xlane.xlu0 %272
    %v274 = vrcp.pop %v270
    %v275 = vrcp.pop %v273
    %v276 = vmul.f32 %v265, %v274
    %v277 = vmul.f32 %v267, %v275
    %v278 = vpack.c.bf16 %v277, %v276
    %279 = vrot.lane.b32.xlu0 %v159, 56
    %v280 = vpop.permute.xlu0 %279
    %v283 = vsel %vm183, %v278, 0
    %285 = vmatpush.bf16.msra.mxu0 0
    %286 = vmatpush.bf16.msra.mxu0 0
    %287 = vmatpush.bf16.msra.mxu0 0
    %288 = vmatpush.bf16.msra.mxu0 0
    %289 = vmatpush.bf16.msra.mxu0 0
    %290 = vmatpush.bf16.msra.mxu0 0
    %291 = vmatpush.bf16.msra.mxu0 0
    %292 = vmatpush.bf16.msra.mxu0 %v280
    %293 = vmatmul.bf16.gmra.mxu0 %v283
    %v294 = vpop.f32.mrf.mxu0
    %v295 = vadd.f32 0.0, %v294
    %v296 = vpop.f32.mrf.mxu0
    %v297 = vadd.f32 0.0, %v296
    %298 = vdwg.mxu0
    %v299 = vpack.c.bf16 %v295, %v295
    %v300 = vpack.c.bf16 %v297, %v297
    %303 = vrot.lane.b32.xlu0 %v299, 8
    %v304 = vpop.permute.xlu0 %303
    %305 = vrot.lane.b32.xlu0 %v300, 8
    %v306 = vpop.permute.xlu0 %305
    %vm309 = vcmask 126016
    %310 = vst.msk [vmem:[#allocation2] sm:$0xf] %vm309, %v304
    %311 = vst.msk [vmem:[#allocation2 + $0x4] sm:$0xf] %vm309, %v306
    %312 = vrot.lane.b32.xlu0 %v154, 112
    %v313 = vpop.permute.xlu0 %312
    %314 = vrot.lane.b32.xlu0 %v159, 80
    %v315 = vpop.permute.xlu0 %314
    %v317 = vsel %vm162, %v313, 0
    %v320 = vsel %vm162, %v315, 0
    %322 = vmatpush.bf16.xpose.msra.mxu0 0
    %323 = vmatpush.bf16.xpose.msra.mxu0 0
    %324 = vmatpush.bf16.xpose.msra.mxu0 0
    %325 = vmatpush.bf16.xpose.msra.mxu0 0
    %326 = vmatpush.bf16.xpose.msra.mxu0 0
    %327 = vmatpush.bf16.xpose.msra.mxu0 0
    %328 = vmatpush.bf16.xpose.msra.mxu0 0
    %329 = vmatpush.bf16.xpose.msra.mxu0 %v320
    %330 = vmatmul.bf16.gmra.mxu0 %v317
    %v331 = vpop.f32.mrf.mxu0
    %v332 = vadd.f32 %v111, %v331
    %v333 = vpop.f32.mrf.mxu0
    %v334 = vadd.f32 %v112, %v333
    %335 = vdwg.mxu0
    %v336 = vsel %vm183, %v332, -inf
    %337 = vmax.xlane.f32.xlu0 %v336
    %v338 = vpop.xlane.xlu0 %337
    %v339 = vsel %vm183, %v334, -inf
    %340 = vmax.xlane.f32.xlu0 %v339
    %v341 = vpop.xlane.xlu0 %340
    %v342 = vsub.f32 %v332, %v338
    %v343 = vsub.f32 %v334, %v341
    %v344 = vmul.f32 %v342, 1.442695
    %v345 = vpow.pop %v344
    %v346 = vmul.f32 %v343, 1.442695
    %v347 = vpow.pop %v346
    %v348 = vsel %vm183, %v345, 0.0
    %349 = vadd.xlane.f32.xlu0 %v348
    %v350 = vpop.xlane.xlu0 %349
    %v351 = vsel %vm183, %v347, 0.0
    %352 = vadd.xlane.f32.xlu0 %v351
    %v353 = vpop.xlane.xlu0 %352
    %v354 = vrcp.pop %v350
    %v355 = vrcp.pop %v353
    %v356 = vmul.f32 %v345, %v354
    %v357 = vmul.f32 %v347, %v355
    %v358 = vpack.c.bf16 %v357, %v356
    %359 = vrot.lane.b32.xlu0 %v159, 48
    %v360 = vpop.permute.xlu0 %359
    %v363 = vsel %vm183, %v358, 0
    %365 = vmatpush.bf16.msra.mxu0 0
    %366 = vmatpush.bf16.msra.mxu0 0
    %367 = vmatpush.bf16.msra.mxu0 0
    %368 = vmatpush.bf16.msra.mxu0 0
    %369 = vmatpush.bf16.msra.mxu0 0
    %370 = vmatpush.bf16.msra.mxu0 0
    %371 = vmatpush.bf16.msra.mxu0 0
    %372 = vmatpush.bf16.msra.mxu0 %v360
    %373 = vmatmul.bf16.gmra.mxu0 %v363
    %v374 = vpop.f32.mrf.mxu0
    %v375 = vadd.f32 0.0, %v374
    %v376 = vpop.f32.mrf.mxu0
    %v377 = vadd.f32 0.0, %v376
    %378 = vdwg.mxu0
    %v379 = vpack.c.bf16 %v375, %v375
    %v380 = vpack.c.bf16 %v377, %v377
    %383 = vrot.lane.b32.xlu0 %v379, 16
    %v384 = vpop.permute.xlu0 %383
    %385 = vrot.lane.b32.xlu0 %v380, 16
    %v386 = vpop.permute.xlu0 %385
    %vm389 = vcmask 191616
    %390 = vst.msk [vmem:[#allocation2] sm:$0xf] %vm389, %v384
    %391 = vst.msk [vmem:[#allocation2 + $0x4] sm:$0xf] %vm389, %v386
    %392 = vrot.lane.b32.xlu0 %v154, 104
    %v393 = vpop.permute.xlu0 %392
    %394 = vrot.lane.b32.xlu0 %v159, 72
    %v395 = vpop.permute.xlu0 %394
    %v397 = vsel %vm162, %v393, 0
    %v400 = vsel %vm162, %v395, 0
    %402 = vmatpush.bf16.xpose.msra.mxu0 0
    %403 = vmatpush.bf16.xpose.msra.mxu0 0
    %404 = vmatpush.bf16.xpose.msra.mxu0 0
    %405 = vmatpush.bf16.xpose.msra.mxu0 0
    %406 = vmatpush.bf16.xpose.msra.mxu0 0
    %407 = vmatpush.bf16.xpose.msra.mxu0 0
    %408 = vmatpush.bf16.xpose.msra.mxu0 0
    %409 = vmatpush.bf16.xpose.msra.mxu0 %v400
    %410 = vmatmul.bf16.gmra.mxu0 %v397
    %v411 = vpop.f32.mrf.mxu0
    %v412 = vadd.f32 %v111, %v411
    %v413 = vpop.f32.mrf.mxu0
    %v414 = vadd.f32 %v112, %v413
    %415 = vdwg.mxu0
    %v416 = vsel %vm183, %v412, -inf
    %417 = vmax.xlane.f32.xlu0 %v416
    %v418 = vpop.xlane.xlu0 %417
    %v419 = vsel %vm183, %v414, -inf
    %420 = vmax.xlane.f32.xlu0 %v419
    %v421 = vpop.xlane.xlu0 %420
    %v422 = vsub.f32 %v412, %v418
    %v423 = vsub.f32 %v414, %v421
    %v424 = vmul.f32 %v422, 1.442695
    %v425 = vpow.pop %v424
    %v426 = vmul.f32 %v423, 1.442695
    %v427 = vpow.pop %v426
    %v428 = vsel %vm183, %v425, 0.0
    %429 = vadd.xlane.f32.xlu0 %v428
    %v430 = vpop.xlane.xlu0 %429
    %v431 = vsel %vm183, %v427, 0.0
    %432 = vadd.xlane.f32.xlu0 %v431
    %v433 = vpop.xlane.xlu0 %432
    %v434 = vrcp.pop %v430
    %v435 = vrcp.pop %v433
    %v436 = vmul.f32 %v425, %v434
    %v437 = vmul.f32 %v427, %v435
    %v438 = vpack.c.bf16 %v437, %v436
    %439 = vrot.lane.b32.xlu0 %v159, 40
    %v440 = vpop.permute.xlu0 %439
    %v443 = vsel %vm183, %v438, 0
    %445 = vmatpush.bf16.msra.mxu0 0
    %446 = vmatpush.bf16.msra.mxu0 0
    %447 = vmatpush.bf16.msra.mxu0 0
    %448 = vmatpush.bf16.msra.mxu0 0
    %449 = vmatpush.bf16.msra.mxu0 0
    %450 = vmatpush.bf16.msra.mxu0 0
    %451 = vmatpush.bf16.msra.mxu0 0
    %452 = vmatpush.bf16.msra.mxu0 %v440
    %453 = vmatmul.bf16.gmra.mxu0 %v443
    %v454 = vpop.f32.mrf.mxu0
    %v455 = vadd.f32 0.0, %v454
    %v456 = vpop.f32.mrf.mxu0
    %v457 = vadd.f32 0.0, %v456
    %458 = vdwg.mxu0
    %v459 = vpack.c.bf16 %v455, %v455
    %v460 = vpack.c.bf16 %v457, %v457
    %463 = vrot.lane.b32.xlu0 %v459, 24
    %v464 = vpop.permute.xlu0 %463
    %465 = vrot.lane.b32.xlu0 %v460, 24
    %v466 = vpop.permute.xlu0 %465
    %vm469 = vcmask 257216
    %470 = vst.msk [vmem:[#allocation2] sm:$0xf] %vm469, %v464
    %471 = vst.msk [vmem:[#allocation2 + $0x4] sm:$0xf] %vm469, %v466
    %v472 = vld [vmem:[#allocation2] sm:$0xf]
    %v473 = vld [vmem:[#allocation2 + $0x4] sm:$0xf]
    %v474 = vperm.slane %v104, 0
    %v477 = vunpack.c.l.b16 %v472
    %v478 = vunpack.c.l.b16 %v473
    %v479 = vpack.c.b16 %v478, %v477
    %v484 = vunpack.c.l.b16 %v87
    %v485 = vunpack.c.l.b16 %v88
    %v486 = vunpack.c.l.b16 %v89
    %v487 = vunpack.c.l.b16 %v90
    %v488 = vpack.c.b16 %v485, %v484
    %v489 = vpack.c.b16 %v487, %v486
    %v493 = vsel %vm126, %v479, 0
    %495 = vmatpush.bf16.msra.mxu0 0
    %496 = vmatpush.bf16.msra.mxu0 0
    %497 = vmatpush.bf16.msra.mxu0 0
    %498 = vmatpush.bf16.msra.mxu0 0
    %499 = vmatpush.bf16.msra.mxu0 0
    %500 = vmatpush.bf16.msra.mxu0 0
    %501 = vmatpush.bf16.msra.mxu0 %v489
    %502 = vmatpush.bf16.msra.mxu0 %v488
    %503 = vmatmul.bf16.gmra.mxu0 %v493
    %v504 = vpop.f32.mrf.mxu0
    %v505 = vadd.f32 %v474, %v504
    %v506 = vpop.f32.mrf.mxu0
    %v507 = vadd.f32 %v474, %v506
    %508 = vdwg.mxu0
    %v509 = vadd.f32 %v80, %v505
    %v510 = vadd.f32 %v81, %v507
    %v511 = vsel %vm126, %v509, 0.0
    %512 = vadd.xlane.f32.xlu0 %v511
    %v513 = vpop.xlane.xlu0 %512
    %v514 = vsel %vm126, %v510, 0.0
    %515 = vadd.xlane.f32.xlu0 %v514
    %v516 = vpop.xlane.xlu0 %515
    %v517 = vrcp.pop 32.0
    %v518 = vmul.f32 32.0, %v517
    %v519 = vsub.f32 1.0, %v518
    %v520 = vmul.f32 %v517, %v519
    %v521 = vadd.f32 %v517, %v520
    %vm522 = vweird.f32 %v517
    %v523 = vsel %vm522, %v517, %v521
    %v524 = vmul.f32 %v513, %v523
    %v525 = vmul.f32 %v516, %v523
    %v526 = vsub.f32 %v509, %v524
    %v527 = vsub.f32 %v510, %v525
    %v528 = vmul.f32 %v526, %v526
    %v529 = vmul.f32 %v527, %v527
    %v530 = vsel %vm126, %v528, 0.0
    %531 = vadd.xlane.f32.xlu0 %v530
    %v532 = vpop.xlane.xlu0 %531
    %v533 = vsel %vm126, %v529, 0.0
    %534 = vadd.xlane.f32.xlu0 %v533
    %v535 = vpop.xlane.xlu0 %534
    %v536 = vmul.f32 %v532, %v523
    %v537 = vmul.f32 %v535, %v523
    %v538 = vadd.f32 %v536, 1e-05
    %v539 = vadd.f32 %v537, 1e-05
    %v540 = vrsqrt.pop %v538
    %v541 = vmul.f32 %v540, %v538
    %v542 = vmul.f32 %v541, %v540
    %v543 = vmul.f32 0.5, %v542
    %v544 = vsub.f32 1.5, %v543
    %v545 = vmul.f32 %v540, %v544
    %vm546 = vweird.f32 %v538
    %vm547 = vweird.f32 %v540
    %vm548 = vmor %vm546, %vm547
    %v549 = vsel %vm548, %v540, %v545
    %v550 = vrsqrt.pop %v539
    %v551 = vmul.f32 %v550, %v539
    %v552 = vmul.f32 %v551, %v550
    %v553 = vmul.f32 0.5, %v552
    %v554 = vsub.f32 1.5, %v553
    %v555 = vmul.f32 %v550, %v554
    %vm556 = vweird.f32 %v539
    %vm557 = vweird.f32 %v550
    %vm558 = vmor %vm556, %vm557
    %v559 = vsel %vm558, %v550, %v555
    %v560 = vmul.f32 %v526, %v549
    %v561 = vmul.f32 %v527, %v559
    %v562 = vperm.slane %v107, 0
    %v563 = vmul.f32 %v560, %v562
    %v564 = vmul.f32 %v561, %v562
    %v565 = vperm.slane %v108, 0
    %v566 = vadd.f32 %v563, %v565
    %v567 = vadd.f32 %v564, %v565
    %v568 = vpack.c.bf16 %v567, %v566
    %v569 = vperm.slane %v105, 0
    %v574 = vunpack.c.l.b16 %v91
    %v575 = vunpack.c.l.b16 %v92
    %v576 = vunpack.c.l.b16 %v93
    %v577 = vunpack.c.l.b16 %v94
    %v578 = vpack.c.b16 %v575, %v574
    %v579 = vpack.c.b16 %v577, %v576
    %v583 = vsel %vm126, %v568, 0
    %585 = vmatpush.bf16.msra.mxu0 0
    %586 = vmatpush.bf16.msra.mxu0 0
    %587 = vmatpush.bf16.msra.mxu0 0
    %588 = vmatpush.bf16.msra.mxu0 0
    %589 = vmatpush.bf16.msra.mxu0 0
    %590 = vmatpush.bf16.msra.mxu0 0
    %591 = vmatpush.bf16.msra.mxu0 %v579
    %592 = vmatpush.bf16.msra.mxu0 %v578
    %593 = vmatmul.bf16.gmra.mxu0 %v583
    %v594 = vpop.f32.mrf.mxu0
    %v595 = vadd.f32 %v569, %v594
    %v596 = vpop.f32.mrf.mxu0
    %v597 = vadd.f32 %v569, %v596
    %598 = vdwg.mxu0
    %v599 = vmax.f32 %v595, 0.0
    %v600 = vmax.f32 %v597, 0.0
    %v601 = vpack.c.bf16 %v600, %v599
    %v602 = vperm.slane %v106, 0
    %v611 = vunpack.c.l.b16 %v95
    %v612 = vunpack.c.l.b16 %v96
    %v613 = vunpack.c.l.b16 %v97
    %v614 = vunpack.c.l.b16 %v98
    %v615 = vunpack.c.l.b16 %v99
    %v616 = vunpack.c.l.b16 %v100
    %v617 = vunpack.c.l.b16 %v101
    %v618 = vunpack.c.l.b16 %v102
    %v619 = vpack.c.b16 %v612, %v611
    %v620 = vpack.c.b16 %v614, %v613
    %v621 = vpack.c.b16 %v616, %v615
    %v622 = vpack.c.b16 %v618, %v617
    %vm627 = vcmask 523264
    %v629 = vsel %vm627, %v601, 0
    %631 = vmatpush.bf16.msra.mxu0 0
    %632 = vmatpush.bf16.msra.mxu0 0
    %633 = vmatpush.bf16.msra.mxu0 0
    %634 = vmatpush.bf16.msra.mxu0 0
    %635 = vmatpush.bf16.msra.mxu0 %v622
    %636 = vmatpush.bf16.msra.mxu0 %v621
    %637 = vmatpush.bf16.msra.mxu0 %v620
    %638 = vmatpush.bf16.msra.mxu0 %v619
    %639 = vmatmul.bf16.gmra.mxu0 %v629
    %v640 = vpop.f32.mrf.mxu0
    %v641 = vadd.f32 %v602, %v640
    %v642 = vpop.f32.mrf.mxu0
    %v643 = vadd.f32 %v602, %v642
    %644 = vdwg.mxu0
    %v645 = vadd.f32 %v566, %v641
    %v646 = vadd.f32 %v567, %v643
    %v647 = vsel %vm126, %v645, 0.0
    %648 = vadd.xlane.f32.xlu0 %v647
    %v649 = vpop.xlane.xlu0 %648
    %v650 = vsel %vm126, %v646, 0.0
    %651 = vadd.xlane.f32.xlu0 %v650
    %v652 = vpop.xlane.xlu0 %651
    %v653 = vmul.f32 %v649, %v523
    %v654 = vmul.f32 %v652, %v523
    %v655 = vsub.f32 %v645, %v653
    %v656 = vsub.f32 %v646, %v654
    %v657 = vmul.f32 %v655, %v655
    %v658 = vmul.f32 %v656, %v656
    %v659 = vsel %vm126, %v657, 0.0
    %660 = vadd.xlane.f32.xlu0 %v659
    %v661 = vpop.xlane.xlu0 %660
    %v662 = vsel %vm126, %v658, 0.0
    %663 = vadd.xlane.f32.xlu0 %v662
    %v664 = vpop.xlane.xlu0 %663
    %v665 = vmul.f32 %v661, %v523
    %v666 = vmul.f32 %v664, %v523
    %v667 = vadd.f32 %v665, 1e-05
    %v668 = vadd.f32 %v666, 1e-05
    %v669 = vrsqrt.pop %v667
    %v670 = vmul.f32 %v669, %v667
    %v671 = vmul.f32 %v670, %v669
    %v672 = vmul.f32 0.5, %v671
    %v673 = vsub.f32 1.5, %v672
    %v674 = vmul.f32 %v669, %v673
    %vm675 = vweird.f32 %v667
    %vm676 = vweird.f32 %v669
    %vm677 = vmor %vm675, %vm676
    %v678 = vsel %vm677, %v669, %v674
    %v679 = vrsqrt.pop %v668
    %v680 = vmul.f32 %v679, %v668
    %v681 = vmul.f32 %v680, %v679
    %v682 = vmul.f32 0.5, %v681
    %v683 = vsub.f32 1.5, %v682
    %v684 = vmul.f32 %v679, %v683
    %vm685 = vweird.f32 %v668
    %vm686 = vweird.f32 %v679
    %vm687 = vmor %vm685, %vm686
    %v688 = vsel %vm687, %v679, %v684
    %v689 = vmul.f32 %v655, %v678
    %v690 = vmul.f32 %v656, %v688
    %v691 = vperm.slane %v109, 0
    %v692 = vmul.f32 %v689, %v691
    %v693 = vmul.f32 %v690, %v691
    %v694 = vperm.slane %v110, 0
    %v695 = vadd.f32 %v692, %v694
    %v696 = vadd.f32 %v693, %v694
    %697 = vst.msk [vmem:[#allocation11] sm:$0xff] %vm126, %v695
    %698 = vst.msk [vmem:[#allocation11 + $0x8] sm:$0xff] %vm126, %v696
    // Predicated region
    $region34: #{transformer_encoder_layer.1} parent=1 // pred_check
      _
    $region35: #{transformer_encoder_layer.1} parent=1 // pred_check_branch
      %700 = sbr.rel (0) target = $region37
    $region36: #{transformer_encoder_layer.1} parent=1 // pred_region
      %702 = vsyncadd [#allocation5], 0
      %s703 = sshll.u32 [#allocation11], 4
      %s704 = int_to_ptr.vmem [resolvable:$true] %s703
      %s705 = sshll.u32 %s4, 4
      %s706 = int_to_ptr.hbm [resolvable:$true] %s705
      %711 = dma.vmem_to_hbm [thread:$0]  %s704, 256, %s706, [#allocation5], 128, 128, 8
    $region37: #{transformer_encoder_layer.1} parent=1 // pred_fallthru
      _
    // Predicated region
    $region38: #{transformer_encoder_layer.1} parent=1 // pred_check
      _
    $region39: #{transformer_encoder_layer.1} parent=1 // pred_check_branch
      %713 = sbr.rel (0) target = $region41
    $region40: #{transformer_encoder_layer.1} parent=1 // pred_region
      %715 = dma.done [#allocation5], 256
    $region41: #{transformer_encoder_layer.1} parent=1 // pred_fallthru
      _
    %716 = vsyncpa [#allocation4], 1
    %717 = vsyncpa [#allocation7], 1
    %718 = vsyncpa [#allocation10], 1
    %719 = vsyncpa [#allocation5], 1

</llo_original>
